<compile_context>
chip_gen: v6e
topology: v6e:2x2x1
jax: 0.10.0
libtpu: 0.0.40
codegen_flags: <defaults>
</compile_context>

<pallas_src>
import functools

import jax
import jax.numpy as jnp
from jax.experimental import pallas as pl
from jax.experimental.pallas import tpu as pltpu

_NEG_BIG = -80.0  # sigmoid(-80) == 0 in f32 and exp(+80) is finite (no inf/NaN anywhere)


def _make_joint_loss_kernel(tile_rows, tiles_per_split, rows_total, needs_row_mask):
    """Grid (B, splits, row_tiles). Blocks: pred/gt (1, C, R, 128); 4 outputs (1,1,1,128)."""

    def kernel(pred_ref, gt_ref, ce_ref, inter_ref, y_ref, z_ref):
        l = pl.program_id(2)

        @pl.when(l == 0)
        def _init():
            ce_ref[...] = jnp.zeros_like(ce_ref)
            inter_ref[...] = jnp.zeros_like(inter_ref)
            y_ref[...] = jnp.zeros_like(y_ref)
            z_ref[...] = jnp.zeros_like(z_ref)

        pred = pred_ref[...].astype(jnp.float32)      # (1, C, R, 128)
        gt = gt_ref[...].astype(jnp.float32)          # (1, C, R, 128)

        if needs_row_mask:
            # Only when the row tiling is ragged: rows past rows_total are OOB garbage.
            s = pl.program_id(1)
            first_row = (s * tiles_per_split + l) * tile_rows
            row = jax.lax.broadcasted_iota(jnp.int32, (1, 1, tile_rows, 128), 2)
            valid = (first_row + row) < rows_total    # (1, 1, R, 128)
            pred = jnp.where(valid, pred, _NEG_BIG)
            gt = jnp.where(valid, gt, 0.0)

        # ---- log-softmax over the class axis (axis=1 is a leading dim: pure VALU) ----
        m = jnp.max(pred, axis=1, keepdims=True)      # (1, 1, R, 128)
        z = pred - m
        e = jnp.exp(z)                                # shared with the sigmoid below
        lse = jnp.log(jnp.sum(e, axis=1, keepdims=True))   # (1, 1, R, 128)

        # CE without materializing logp: -sum_c gt*(z - lse) = lse*sum_c(gt) - sum_c(gt*z)
        gt_c = jnp.sum(gt, axis=1)                    # (1, R, 128)  (also feeds y_sum)
        gz = jnp.sum(gt * z, axis=1)                  # (1, R, 128)
        ce_pos = lse[:, 0] * gt_c - gz                # (1, R, 128)

        # ---- sigmoid(pred) = e / (e + exp(-m)); approx reciprocal + 1 Newton step ----
        denom = e + jnp.exp(jnp.clip(-m, -80.0, 80.0))   # clip keeps denom finite & > 0
        r = pl.reciprocal(denom, approx=True)
        r = r * (2.0 - denom * r)                     # NR refine: ~2^-22 relative error
        p = e * r                                     # (1, C, R, 128)

        pg_c = jnp.sum(p * gt, axis=1)                # (1, R, 128)
        p_c = jnp.sum(p, axis=1)                      # (1, R, 128)

        # Sublane-reduce to per-lane partials; the 128-lane reduce happens in the wrapper.
        ce_ref[...] += jnp.sum(ce_pos, axis=1).reshape(ce_ref.shape)
        inter_ref[...] += jnp.sum(pg_c, axis=1).reshape(inter_ref.shape)
        y_ref[...] += jnp.sum(gt_c, axis=1).reshape(y_ref.shape)
        z_ref[...] += jnp.sum(p_c, axis=1).reshape(z_ref.shape)

    return kernel


def _vmem_limit_bytes():
    """Generation-aware scoped-VMEM limit (96 MiB on 128 MiB parts, 48 MiB on v7x)."""
    try:
        cap = pltpu.get_tpu_info().vmem_capacity_bytes
    except Exception:
        cap = 64 * 1024 * 1024  # conservative (v7x per-TC)
    return int(min(cap * 3 // 4, 96 * 1024 * 1024))


def _default_tile_rows(rows_total, C, pred_itemsize, gt_itemsize, vmem_limit):
    """Largest row-tile whose inputs AND f32 intermediates fit the VMEM budget."""
    # Per 128-lane row: 2x double-buffered inputs (native dtype) + ~6 live full-C f32
    # temps (pred/gt upcasts, z, e, denom/p, p*gt) + ~6 (1, R, 128) f32 temps.
    bytes_per_row = 128 * (2 * C * (pred_itemsize + gt_itemsize) + 6 * C * 4 + 6 * 4)
    budget = max(vmem_limit - (2 << 20), 1 << 20)
    max_rows = max(8, (budget // bytes_per_row) // 8 * 8)
    max_rows = min(max_rows, 8192)
    if rows_total <= max_rows:
        return rows_total                      # single full-width tile (always legal)
    if rows_total % 8 == 0:
        t = max_rows
        while t >= 8 and rows_total % t != 0:  # prefer a divisor -> no ragged last tile
            t -= 8
        if t >= 8:
            return t
    return max_rows                            # ragged -> in-kernel row mask


@functools.partial(jax.jit, static_argnames=("tile_rows", "num_splits"))
def joint_loss(pred, gt, *, tile_rows=None, num_splits=None):
    """pred, gt: (B, C, L). gt may be f32/bf16/int8/bool (upcast in-kernel). Scalar loss."""
    B, C, L = pred.shape
    assert gt.shape == (B, C, L)

    # Pad L to a 128 multiple with neutral values (pred=-80 -> sigmoid==0, gt=0) so the
    # reshape to (B, C, rows, 128) is free and full tiles never pay a lane mask.
    L_pad = -(-L // 128) * 128
    if L_pad != L:
        padw = ((0, 0), (0, 0), (0, L_pad - L))
        pred = jnp.pad(pred, padw, constant_values=_NEG_BIG)
        gt = jnp.pad(gt, padw, constant_values=0)
    rows_total = L_pad // 128

    vmem_limit = _vmem_limit_bytes()
    if tile_rows is None:
        tile_rows = _default_tile_rows(rows_total, C, pred.dtype.itemsize,
                                       gt.dtype.itemsize, vmem_limit)
    tile_rows = int(min(tile_rows, rows_total))
    if tile_rows != rows_total:
        tile_rows = max(8, (tile_rows // 8) * 8)   # sublane alignment when not full-dim
    n_tiles = -(-rows_total // tile_rows)
    needs_row_mask = (rows_total % tile_rows) != 0

    # Optional split of the L reduction across the two v7x TensorCores when B is small.
    if num_splits is None:
        num_splits = 2 if (B == 1 and n_tiles >= 2 and n_tiles % 2 == 0) else 1
    if num_splits < 1 or n_tiles % num_splits != 0:
        num_splits = 1
    tiles_per_split = n_tiles // num_splits

    pred4 = pred.reshape(B, C, rows_total, 128)
    gt4 = gt.reshape(B, C, rows_total, 128)

    kernel = _make_joint_loss_kernel(tile_rows, tiles_per_split, rows_total, needs_row_mask)

    in_spec = pl.BlockSpec((1, C, tile_rows, 128),
                           lambda b, s, l: (b, 0, s * tiles_per_split + l, 0))
    # Same output block index across l -> resident per-(batch, split) accumulators.
    out_spec = pl.BlockSpec((1, 1, 1, 128), lambda b, s, l: (b, s, 0, 0))
    part_shape = jax.ShapeDtypeStruct((B, num_splits, 1, 128), jnp.float32)

    ce_p, inter_p, y_p, z_p = pl.pallas_call(
        kernel,
        out_shape=(part_shape,) * 4,
        grid=(B, num_splits, tiles_per_split),
        in_specs=[in_spec, in_spec],
        out_specs=(out_spec,) * 4,
        compiler_params=pltpu.CompilerParams(
            dimension_semantics=("parallel", "parallel", "arbitrary"),
            vmem_limit_bytes=vmem_limit,
        ),
    )(pred4, gt4)

    # Tiny scalar glue in plain JAX: lane reduce + split/batch combine + eps/means.
    ce_sum = jnp.sum(ce_p, axis=(1, 2, 3))      # (B,)
    inter = jnp.sum(inter_p, axis=(1, 2, 3))
    y_sum = jnp.sum(y_p, axis=(1, 2, 3))
    z_sum = jnp.sum(z_p, axis=(1, 2, 3))

    eps = 1e-5
    ce = jnp.sum(ce_sum) / (B * L)              # CE mean over B*L (original L)
    dice = jnp.mean(1.0 - (2.0 * inter + eps) / (z_sum + y_sum + eps))
    return ce + dice


def joint_loss_ref(pred, gt):
    """Pure-JAX reference matching the PyTorch module."""
    gt = gt.astype(jnp.float32)
    logp = jax.nn.log_softmax(pred, axis=1)
    ce = -jnp.mean(jnp.sum(gt * logp, axis=1))
    p = jax.nn.sigmoid(pred)
    eps = 1e-5
    inter = jnp.sum(p * gt, axis=(1, 2))
    y_sum = jnp.sum(gt, axis=(1, 2))
    z_sum = jnp.sum(p, axis=(1, 2))
    dice = jnp.mean(1.0 - (2.0 * inter + eps) / (z_sum + y_sum + eps))
    return ce + dice


if __name__ == "__main__":
    B, C, H, W = 2, 4, 16, 16
    L = H * W

    key = jax.random.PRNGKey(0)
    ks = jax.random.split(key, 6)

    # Logits in f32; gt is a 0/1 mask stored as bf16 (exact) to halve its HBM traffic.
    pred = jax.random.normal(ks[0], (B, C, L), dtype=jnp.float32)
    gt = (jax.random.uniform(ks[1], (B, C, L)) < 0.5).astype(jnp.bfloat16)
    out = jax.block_until_ready(joint_loss(pred, gt))
    ref = jax.block_until_ready(joint_loss_ref(pred, gt))
    assert jnp.isfinite(out), "kernel produced non-finite loss"
    assert jnp.allclose(out, ref, rtol=1e-4, atol=1e-4), (out, ref)

    # Ragged L (not a multiple of 128): wrapper pads with neutral values.
    L2 = 200
    pred2 = jax.random.normal(ks[2], (B, C, L2), dtype=jnp.float32)
    gt2 = (jax.random.uniform(ks[3], (B, C, L2)) < 0.5).astype(jnp.float32)
    out2 = jax.block_until_ready(joint_loss(pred2, gt2))
    ref2 = jax.block_until_ready(joint_loss_ref(pred2, gt2))
    assert jnp.isfinite(out2), "kernel produced non-finite loss (ragged L)"
    assert jnp.allclose(out2, ref2, rtol=1e-4, atol=1e-4), (out2, ref2)

    # Multi-tile accumulation + ragged row tiling (in-kernel row mask) + B==1 two-way
    # core split (v7x megacore path; harmless extra grid level on 1-TC chips).
    B3, L3 = 1, 128 * 12   # rows_total = 12, tile_rows = 8 -> 2 tiles, last one ragged
    pred3 = jax.random.normal(ks[4], (B3, C, L3), dtype=jnp.float32)
    gt3 = (jax.random.uniform(ks[5], (B3, C, L3)) < 0.5).astype(jnp.bfloat16)
    out3 = jax.block_until_ready(joint_loss(pred3, gt3, tile_rows=8))
    ref3 = jax.block_until_ready(joint_loss_ref(pred3, gt3))
    assert jnp.isfinite(out3), "kernel produced non-finite loss (split/mask case)"
    assert jnp.allclose(out3, ref3, rtol=1e-4, atol=1e-4), (out3, ref3)

    print("KERNEL_OK")
</pallas_src>

<mosaic_0001>
module attributes {stable_mosaic.version = 11 : i64} {
  func.func @kernel(%arg0: i32, %arg1: i32, %arg2: i32, %arg3: memref<1x4x2x128xf32, #tpu.memory_space<vmem>>, %arg4: memref<1x4x2x128xbf16, #tpu.memory_space<vmem>>, %arg5: memref<1x1x1x128xf32, #tpu.memory_space<vmem>>, %arg6: memref<1x1x1x128xf32, #tpu.memory_space<vmem>>, %arg7: memref<1x1x1x128xf32, #tpu.memory_space<vmem>>, %arg8: memref<1x1x1x128xf32, #tpu.memory_space<vmem>>) attributes {dimension_semantics = [#tpu.dimension_semantics<parallel>, #tpu.dimension_semantics<parallel>, #tpu.dimension_semantics<arbitrary>], iteration_bounds = array<i64: 2, 1, 1>, scalar_prefetch = 0 : i64, scratch_operands = 0 : i64, tpu.core_type = #tpu.core_type<tc>, window_params = [{transform_indices = @transform_0, window_bounds = array<i64: 1, 4, 2, 128>}, {transform_indices = @transform_1, window_bounds = array<i64: 1, 4, 2, 128>}, {transform_indices = @transform_2, window_bounds = array<i64: 1, 1, 1, 128>}, {transform_indices = @transform_3, window_bounds = array<i64: 1, 1, 1, 128>}, {transform_indices = @transform_4, window_bounds = array<i64: 1, 1, 1, 128>}, {transform_indices = @transform_5, window_bounds = array<i64: 1, 1, 1, 128>}]} {
    %c0_i32 = arith.constant 0 : i32
    %0 = arith.cmpi eq, %arg2, %c0_i32 : i32
    %1 = arith.extui %0 : i1 to i32
    %c0_i32_0 = arith.constant 0 : i32
    %2 = arith.cmpi ne, %1, %c0_i32_0 : i32
    scf.if %2 {
      %cst_53 = arith.constant 0.000000e+00 : f32
      %58 = vector.broadcast %cst_53 : f32 to vector<1x1x1x128xf32>
      %c0_54 = arith.constant 0 : index
      %c0_55 = arith.constant 0 : index
      %c0_56 = arith.constant 0 : index
      %c0_57 = arith.constant 0 : index
      %59 = vector.load %arg5[%c0_54, %c0_55, %c0_56, %c0_57] : memref<1x1x1x128xf32, #tpu.memory_space<vmem>>, vector<1x1x1x128xf32>
      tpu.vector_store %arg5[%c0_54, %c0_55, %c0_56, %c0_57], %58 {strides = array<i32>} : memref<1x1x1x128xf32, #tpu.memory_space<vmem>>, vector<1x1x1x128xf32>,
      %cst_58 = arith.constant 0.000000e+00 : f32
      %60 = vector.broadcast %cst_58 : f32 to vector<1x1x1x128xf32>
      %c0_59 = arith.constant 0 : index
      %c0_60 = arith.constant 0 : index
      %c0_61 = arith.constant 0 : index
      %c0_62 = arith.constant 0 : index
      %61 = vector.load %arg6[%c0_59, %c0_60, %c0_61, %c0_62] : memref<1x1x1x128xf32, #tpu.memory_space<vmem>>, vector<1x1x1x128xf32>
      tpu.vector_store %arg6[%c0_59, %c0_60, %c0_61, %c0_62], %60 {strides = array<i32>} : memref<1x1x1x128xf32, #tpu.memory_space<vmem>>, vector<1x1x1x128xf32>,
      %cst_63 = arith.constant 0.000000e+00 : f32
      %62 = vector.broadcast %cst_63 : f32 to vector<1x1x1x128xf32>
      %c0_64 = arith.constant 0 : index
      %c0_65 = arith.constant 0 : index
      %c0_66 = arith.constant 0 : index
      %c0_67 = arith.constant 0 : index
      %63 = vector.load %arg7[%c0_64, %c0_65, %c0_66, %c0_67] : memref<1x1x1x128xf32, #tpu.memory_space<vmem>>, vector<1x1x1x128xf32>
      tpu.vector_store %arg7[%c0_64, %c0_65, %c0_66, %c0_67], %62 {strides = array<i32>} : memref<1x1x1x128xf32, #tpu.memory_space<vmem>>, vector<1x1x1x128xf32>,
      %cst_68 = arith.constant 0.000000e+00 : f32
      %64 = vector.broadcast %cst_68 : f32 to vector<1x1x1x128xf32>
      %c0_69 = arith.constant 0 : index
      %c0_70 = arith.constant 0 : index
      %c0_71 = arith.constant 0 : index
      %c0_72 = arith.constant 0 : index
      %65 = vector.load %arg8[%c0_69, %c0_70, %c0_71, %c0_72] : memref<1x1x1x128xf32, #tpu.memory_space<vmem>>, vector<1x1x1x128xf32>
      tpu.vector_store %arg8[%c0_69, %c0_70, %c0_71, %c0_72], %64 {strides = array<i32>} : memref<1x1x1x128xf32, #tpu.memory_space<vmem>>, vector<1x1x1x128xf32>,
    } else {
    }
    %c0 = arith.constant 0 : index
    %c0_1 = arith.constant 0 : index
    %c0_2 = arith.constant 0 : index
    %c0_3 = arith.constant 0 : index
    %3 = vector.load %arg3[%c0, %c0_1, %c0_2, %c0_3] : memref<1x4x2x128xf32, #tpu.memory_space<vmem>>, vector<1x4x2x128xf32>
    %c0_4 = arith.constant 0 : index
    %c0_5 = arith.constant 0 : index
    %c0_6 = arith.constant 0 : index
    %c0_7 = arith.constant 0 : index
    %4 = vector.load %arg4[%c0_4, %c0_5, %c0_6, %c0_7] : memref<1x4x2x128xbf16, #tpu.memory_space<vmem>>, vector<1x4x2x128xbf16>
    %5 = arith.extf %4 : vector<1x4x2x128xbf16> to vector<1x4x2x128xf32>
    %cst = arith.constant dense<0xFF800000> : vector<1x2x128xf32>
    %6 = vector.multi_reduction <maximumf>, %3, %cst [1] : vector<1x4x2x128xf32> to vector<1x2x128xf32>
    %7 = vector.shape_cast %6 : vector<1x2x128xf32> to vector<1x1x2x128xf32>
    %8 = vector.broadcast %7 : vector<1x1x2x128xf32> to vector<1x4x2x128xf32>
    %9 = arith.subf %3, %8 : vector<1x4x2x128xf32>
    %10 = math.exp %9 : vector<1x4x2x128xf32>
    %cst_8 = arith.constant dense<0.000000e+00> : vector<1x2x128xf32>
    %11 = vector.multi_reduction <add>, %10, %cst_8 [1] : vector<1x4x2x128xf32> to vector<1x2x128xf32>
    %12 = vector.shape_cast %11 : vector<1x2x128xf32> to vector<1x1x2x128xf32>
    %13 = math.log %12 : vector<1x1x2x128xf32>
    %cst_9 = arith.constant dense<0.000000e+00> : vector<1x2x128xf32>
    %14 = vector.multi_reduction <add>, %5, %cst_9 [1] : vector<1x4x2x128xf32> to vector<1x2x128xf32>
    %15 = arith.mulf %5, %9 : vector<1x4x2x128xf32>
    %cst_10 = arith.constant dense<0.000000e+00> : vector<1x2x128xf32>
    %16 = vector.multi_reduction <add>, %15, %cst_10 [1] : vector<1x4x2x128xf32> to vector<1x2x128xf32>
    %17 = vector.shape_cast %13 : vector<1x1x2x128xf32> to vector<1x2x128xf32>
    %18 = arith.mulf %17, %14 : vector<1x2x128xf32>
    %19 = arith.subf %18, %16 : vector<1x2x128xf32>
    %cst_11 = arith.constant 0.000000e+00 : f32
    %20 = vector.broadcast %cst_11 : f32 to vector<1x1x2x128xf32>
    %21 = arith.subf %20, %7 : vector<1x1x2x128xf32>
    %cst_12 = arith.constant -8.000000e+01 : f32
    %cst_13 = arith.constant 8.000000e+01 : f32
    %22 = vector.broadcast %cst_12 : f32 to vector<1x1x2x128xf32>
    %23 = arith.maximumf %22, %21 : vector<1x1x2x128xf32>
    %24 = vector.broadcast %cst_13 : f32 to vector<1x1x2x128xf32>
    %25 = arith.minimumf %24, %23 : vector<1x1x2x128xf32>
    %26 = math.exp %25 : vector<1x1x2x128xf32>
    %27 = vector.broadcast %26 : vector<1x1x2x128xf32> to vector<1x4x2x128xf32>
    %28 = arith.addf %10, %27 : vector<1x4x2x128xf32>
    %29 = tpu.reciprocal %28 {approx = true} : vector<1x4x2x128xf32> -> vector<1x4x2x128xf32>
    %30 = arith.mulf %28, %29 : vector<1x4x2x128xf32>
    %cst_14 = arith.constant 2.000000e+00 : f32
    %31 = vector.broadcast %cst_14 : f32 to vector<1x4x2x128xf32>
    %32 = arith.subf %31, %30 : vector<1x4x2x128xf32>
    %33 = arith.mulf %29, %32 : vector<1x4x2x128xf32>
    %34 = arith.mulf %10, %33 : vector<1x4x2x128xf32>
    %35 = arith.mulf %34, %5 : vector<1x4x2x128xf32>
    %cst_15 = arith.constant dense<0.000000e+00> : vector<1x2x128xf32>
    %36 = vector.multi_reduction <add>, %35, %cst_15 [1] : vector<1x4x2x128xf32> to vector<1x2x128xf32>
    %cst_16 = arith.constant dense<0.000000e+00> : vector<1x2x128xf32>
    %37 = vector.multi_reduction <add>, %34, %cst_16 [1] : vector<1x4x2x128xf32> to vector<1x2x128xf32>
    %c0_17 = arith.constant 0 : index
    %c0_18 = arith.constant 0 : index
    %c0_19 = arith.constant 0 : index
    %c0_20 = arith.constant 0 : index
    %38 = vector.load %arg5[%c0_17, %c0_18, %c0_19, %c0_20] : memref<1x1x1x128xf32, #tpu.memory_space<vmem>>, vector<1x1x1x128xf32>
    %cst_21 = arith.constant dense<0.000000e+00> : vector<1x128xf32>
    %39 = vector.multi_reduction <add>, %19, %cst_21 [1] : vector<1x2x128xf32> to vector<1x128xf32>
    %40 = vector.shape_cast %39 : vector<1x128xf32> to vector<1x1x1x128xf32>
    %41 = arith.addf %38, %40 : vector<1x1x1x128xf32>
    %c0_22 = arith.constant 0 : index
    %c0_23 = arith.constant 0 : index
    %c0_24 = arith.constant 0 : index
    %c0_25 = arith.constant 0 : index
    %42 = vector.load %arg5[%c0_22, %c0_23, %c0_24, %c0_25] : memref<1x1x1x128xf32, #tpu.memory_space<vmem>>, vector<1x1x1x128xf32>
    tpu.vector_store %arg5[%c0_22, %c0_23, %c0_24, %c0_25], %41 {strides = array<i32>} : memref<1x1x1x128xf32, #tpu.memory_space<vmem>>, vector<1x1x1x128xf32>,
    %c0_26 = arith.constant 0 : index
    %c0_27 = arith.constant 0 : index
    %c0_28 = arith.constant 0 : index
    %c0_29 = arith.constant 0 : index
    %43 = vector.load %arg6[%c0_26, %c0_27, %c0_28, %c0_29] : memref<1x1x1x128xf32, #tpu.memory_space<vmem>>, vector<1x1x1x128xf32>
    %cst_30 = arith.constant dense<0.000000e+00> : vector<1x128xf32>
    %44 = vector.multi_reduction <add>, %36, %cst_30 [1] : vector<1x2x128xf32> to vector<1x128xf32>
    %45 = vector.shape_cast %44 : vector<1x128xf32> to vector<1x1x1x128xf32>
    %46 = arith.addf %43, %45 : vector<1x1x1x128xf32>
    %c0_31 = arith.constant 0 : index
    %c0_32 = arith.constant 0 : index
    %c0_33 = arith.constant 0 : index
    %c0_34 = arith.constant 0 : index
    %47 = vector.load %arg6[%c0_31, %c0_32, %c0_33, %c0_34] : memref<1x1x1x128xf32, #tpu.memory_space<vmem>>, vector<1x1x1x128xf32>
    tpu.vector_store %arg6[%c0_31, %c0_32, %c0_33, %c0_34], %46 {strides = array<i32>} : memref<1x1x1x128xf32, #tpu.memory_space<vmem>>, vector<1x1x1x128xf32>,
    %c0_35 = arith.constant 0 : index
    %c0_36 = arith.constant 0 : index
    %c0_37 = arith.constant 0 : index
    %c0_38 = arith.constant 0 : index
    %48 = vector.load %arg7[%c0_35, %c0_36, %c0_37, %c0_38] : memref<1x1x1x128xf32, #tpu.memory_space<vmem>>, vector<1x1x1x128xf32>
    %cst_39 = arith.constant dense<0.000000e+00> : vector<1x128xf32>
    %49 = vector.multi_reduction <add>, %14, %cst_39 [1] : vector<1x2x128xf32> to vector<1x128xf32>
    %50 = vector.shape_cast %49 : vector<1x128xf32> to vector<1x1x1x128xf32>
    %51 = arith.addf %48, %50 : vector<1x1x1x128xf32>
    %c0_40 = arith.constant 0 : index
    %c0_41 = arith.constant 0 : index
    %c0_42 = arith.constant 0 : index
    %c0_43 = arith.constant 0 : index
    %52 = vector.load %arg7[%c0_40, %c0_41, %c0_42, %c0_43] : memref<1x1x1x128xf32, #tpu.memory_space<vmem>>, vector<1x1x1x128xf32>
    tpu.vector_store %arg7[%c0_40, %c0_41, %c0_42, %c0_43], %51 {strides = array<i32>} : memref<1x1x1x128xf32, #tpu.memory_space<vmem>>, vector<1x1x1x128xf32>,
    %c0_44 = arith.constant 0 : index
    %c0_45 = arith.constant 0 : index
    %c0_46 = arith.constant 0 : index
    %c0_47 = arith.constant 0 : index
    %53 = vector.load %arg8[%c0_44, %c0_45, %c0_46, %c0_47] : memref<1x1x1x128xf32, #tpu.memory_space<vmem>>, vector<1x1x1x128xf32>
    %cst_48 = arith.constant dense<0.000000e+00> : vector<1x128xf32>
    %54 = vector.multi_reduction <add>, %37, %cst_48 [1] : vector<1x2x128xf32> to vector<1x128xf32>
    %55 = vector.shape_cast %54 : vector<1x128xf32> to vector<1x1x1x128xf32>
    %56 = arith.addf %53, %55 : vector<1x1x1x128xf32>
    %c0_49 = arith.constant 0 : index
    %c0_50 = arith.constant 0 : index
    %c0_51 = arith.constant 0 : index
    %c0_52 = arith.constant 0 : index
    %57 = vector.load %arg8[%c0_49, %c0_50, %c0_51, %c0_52] : memref<1x1x1x128xf32, #tpu.memory_space<vmem>>, vector<1x1x1x128xf32>
    tpu.vector_store %arg8[%c0_49, %c0_50, %c0_51, %c0_52], %56 {strides = array<i32>} : memref<1x1x1x128xf32, #tpu.memory_space<vmem>>, vector<1x1x1x128xf32>,
    return
  }
  func.func @transform_0(%arg0: i32, %arg1: i32, %arg2: i32) -> (i32, i32, i32, i32) {
    %c1_i32 = arith.constant 1 : i32
    %0 = arith.muli %arg1, %c1_i32 : i32
    %1 = arith.addi %0, %arg2 : i32
    %c0_i32 = arith.constant 0 : i32
    %c0_i32_0 = arith.constant 0 : i32
    %c0_i32_1 = arith.constant 0 : i32
    return %arg0, %c0_i32, %1, %c0_i32_0 : i32, i32, i32, i32
  }
  func.func @transform_1(%arg0: i32, %arg1: i32, %arg2: i32) -> (i32, i32, i32, i32) {
    %c1_i32 = arith.constant 1 : i32
    %0 = arith.muli %arg1, %c1_i32 : i32
    %1 = arith.addi %0, %arg2 : i32
    %c0_i32 = arith.constant 0 : i32
    %c0_i32_0 = arith.constant 0 : i32
    %c0_i32_1 = arith.constant 0 : i32
    return %arg0, %c0_i32, %1, %c0_i32_0 : i32, i32, i32, i32
  }
  func.func @transform_2(%arg0: i32, %arg1: i32, %arg2: i32) -> (i32, i32, i32, i32) {
    %c0_i32 = arith.constant 0 : i32
    %c0_i32_0 = arith.constant 0 : i32
    %c0_i32_1 = arith.constant 0 : i32
    return %arg0, %arg1, %c0_i32, %c0_i32_0 : i32, i32, i32, i32
  }
  func.func @transform_3(%arg0: i32, %arg1: i32, %arg2: i32) -> (i32, i32, i32, i32) {
    %c0_i32 = arith.constant 0 : i32
    %c0_i32_0 = arith.constant 0 : i32
    %c0_i32_1 = arith.constant 0 : i32
    return %arg0, %arg1, %c0_i32, %c0_i32_0 : i32, i32, i32, i32
  }
  func.func @transform_4(%arg0: i32, %arg1: i32, %arg2: i32) -> (i32, i32, i32, i32) {
    %c0_i32 = arith.constant 0 : i32
    %c0_i32_0 = arith.constant 0 : i32
    %c0_i32_1 = arith.constant 0 : i32
    return %arg0, %arg1, %c0_i32, %c0_i32_0 : i32, i32, i32, i32
  }
  func.func @transform_5(%arg0: i32, %arg1: i32, %arg2: i32) -> (i32, i32, i32, i32) {
    %c0_i32 = arith.constant 0 : i32
    %c0_i32_0 = arith.constant 0 : i32
    %c0_i32_1 = arith.constant 0 : i32
    return %arg0, %arg1, %c0_i32, %c0_i32_0 : i32, i32, i32, i32
  }
}

</mosaic_0001>

<llo_original>
// kernel: joint_loss.1
$region0: #{joint_loss.1}
  #allocation0 [shape = 'u32[]', space=smem, size = 0x4, offset = 0x4, fixed_abs, tag = 'smem constant byte address 0x4 - core index']
  #allocation1 [shape = 'u32[144,128]{1,0:T(1,128)}', space=vmem, size = 0x12000, scoped, tag = 'internal scratch']
  %s0 = inlined_call_operand.vmem [shape: f32[2,4,2,128], index: 0, kind: input, shape index: {}]
  %s1 = inlined_call_operand.vmem [shape: bf16[2,4,2,128], index: 1, kind: input, shape index: {}]
  %s2 = inlined_call_operand.vmem [shape: f32[2,1,1,128], index: 2, kind: output, shape index: {0}]
  %s3 = inlined_call_operand.vmem [shape: f32[2,1,1,128], index: 3, kind: output, shape index: {1}]
  %s4 = inlined_call_operand.vmem [shape: f32[2,1,1,128], index: 4, kind: output, shape index: {2}]
  %s5 = inlined_call_operand.vmem [shape: f32[2,1,1,128], index: 5, kind: output, shape index: {3}]
  %6 = xla_tuple %s2, %s3, %s4, %s5
  %s7 = sld [smem:[#allocation0]]
  $region69: #{joint_loss.1} parent=0
    _
  %s9 = ssub.s32 1, %s7
  %s10 = scalar_select 0, %s9, %s7
  loop: start=0, step=1, limit=4
  $region2: #{joint_loss.1} parent=0 // loop_pre_header
    _
  $region3: #{joint_loss.1} parent=0 // loop_header
    %s12 = sphi 0, %s16
    %p13 = scmp.ge.s32.totalorder %s12, 4
    %s19 = sphi 0, %s38
    %s20 = sphi 0, %s34
    %s21 = sphi 0, %s30
    %s22 = sphi 0, %s19
    %s23 = sphi 0, %s20
    %s24 = sphi 0, %s21
    %s25 = sphi 0, %s22
    %s26 = sphi 0, %s23
    %s27 = sphi 0, %s24
    %s45 = sphi 0, %s47
    %s48 = sphi 0, %s45
    %s49 = sphi 0, %s48
    %s65 = sphi 0, %s49
    %s75 = sphi 0, %s77
    %s78 = sphi 0, %s75
    %s79 = sphi 0, %s78
    %s95 = sphi 0, %s79
    %s103 = sphi 0, %s105
    %s106 = sphi 0, %s103
    %s107 = sphi 0, %s106
    %s123 = sphi 0, %s107
    %s131 = sphi 0, %s133
    %s134 = sphi 0, %s131
    %s135 = sphi 0, %s134
    %s151 = sphi 0, %s135
    %s159 = sphi 0, %s161
    %s162 = sphi 0, %s159
    %s163 = sphi 0, %s162
    %s179 = sphi 0, %s163
    %s187 = sphi 0, %s189
    %s190 = sphi 0, %s187
    %s191 = sphi 0, %s190
    %s207 = sphi 0, %s191
  $region4: #{joint_loss.1} parent=0 // loop_header_branch
    %15 = sbr.rel (%p13) target = $region8
  $region5: #{joint_loss.1} parent=0 // loop_body
    %s17 = ssub.s32 %s12, 1
    %s18 = ssub.s32 %s12, 2
    %s28 = sadd.s32 1, %s21
    %p29 = scmp.ge.s32.totalorder %s28, 1
    %s30 = scalar_select %p29, 0, %s28
    %s31 = sadd.s32 1, %s20
    %s32 = scalar_select %p29, %s31, %s20
    %p33 = scmp.ge.s32.totalorder %s32, 1
    %s34 = scalar_select %p33, 0, %s32
    %s35 = sadd.s32 1, %s19
    %s36 = scalar_select %p33, %s35, %s19
    %p37 = scmp.ge.s32.totalorder %s36, 2
    %s38 = scalar_select %p37, 0, %s36
    %s39 = sadd.s32 %s20, %s21
    %s40 = sadd.s32 %s34, %s30
    %s41 = ssub.s32 %s19, %s38
    %s42 = ssub.s32 %s39, %s40
    %s43 = sor.u32 %s41, %s42
    %p44 = scmp.eq.s32.totalorder %s43, 0
    %s46 = sadd.s32 %s45, 1
    %s47 = scalar_select %p44, %s45, %s46
    %p50 = pneg %p44
    %p51 = scmp.eq.s32.totalorder %s12, 1
    %p52 = por %p50, %p51
    %p53 = scmp.ne.s32.totalorder %s45, %s48
    %p54 = scmp.eq.s32.totalorder %s12, 0
    %p55 = por %p53, %p54
    %p56 = scmp.ne.s32.totalorder %s45, %s48
    %p57 = scmp.eq.s32.totalorder %s17, 1
    %p58 = por %p56, %p57
    %p59 = scmp.ne.s32.totalorder %s48, %s49
    %p60 = scmp.eq.s32.totalorder %s17, 0
    %p61 = por %p59, %p60
    %p62 = scmp.ne.s32.totalorder %s48, %s49
    %p63 = scmp.eq.s32.totalorder %s18, 1
    %p64 = por %p62, %p63
    %p66 = scmp.ne.s32.totalorder %s49, %s65
    %p67 = scmp.eq.s32.totalorder %s18, 0
    %p68 = por %p66, %p67
    %s69 = sadd.s32 %s20, %s21
    %s70 = sadd.s32 %s34, %s30
    %s71 = ssub.s32 %s19, %s38
    %s72 = ssub.s32 %s69, %s70
    %s73 = sor.u32 %s71, %s72
    %p74 = scmp.eq.s32.totalorder %s73, 0
    %s76 = sadd.s32 %s75, 1
    %s77 = scalar_select %p74, %s75, %s76
    %p80 = pneg %p74
    %p81 = scmp.eq.s32.totalorder %s12, 1
    %p82 = por %p80, %p81
    %p83 = scmp.ne.s32.totalorder %s75, %s78
    %p84 = scmp.eq.s32.totalorder %s12, 0
    %p85 = por %p83, %p84
    %p86 = scmp.ne.s32.totalorder %s75, %s78
    %p87 = scmp.eq.s32.totalorder %s17, 1
    %p88 = por %p86, %p87
    %p89 = scmp.ne.s32.totalorder %s78, %s79
    %p90 = scmp.eq.s32.totalorder %s17, 0
    %p91 = por %p89, %p90
    %p92 = scmp.ne.s32.totalorder %s78, %s79
    %p93 = scmp.eq.s32.totalorder %s18, 1
    %p94 = por %p92, %p93
    %p96 = scmp.ne.s32.totalorder %s79, %s95
    %p97 = scmp.eq.s32.totalorder %s18, 0
    %p98 = por %p96, %p97
    %s99 = ssub.s32 %s19, %s38
    %s100 = ssub.s32 %s20, %s34
    %s101 = sor.u32 %s99, %s100
    %p102 = scmp.eq.s32.totalorder %s101, 0
    %s104 = sadd.s32 %s103, 1
    %s105 = scalar_select %p102, %s103, %s104
    %p108 = pneg %p102
    %p109 = scmp.eq.s32.totalorder %s12, 1
    %p110 = por %p108, %p109
    %p111 = scmp.ne.s32.totalorder %s103, %s106
    %p112 = scmp.eq.s32.totalorder %s12, 0
    %p113 = por %p111, %p112
    %p114 = scmp.ne.s32.totalorder %s103, %s106
    %p115 = scmp.eq.s32.totalorder %s17, 1
    %p116 = por %p114, %p115
    %p117 = scmp.ne.s32.totalorder %s106, %s107
    %p118 = scmp.eq.s32.totalorder %s17, 0
    %p119 = por %p117, %p118
    %p120 = scmp.ne.s32.totalorder %s106, %s107
    %p121 = scmp.eq.s32.totalorder %s18, 1
    %p122 = por %p120, %p121
    %p124 = scmp.ne.s32.totalorder %s107, %s123
    %p125 = scmp.eq.s32.totalorder %s18, 0
    %p126 = por %p124, %p125
    %s127 = ssub.s32 %s19, %s38
    %s128 = ssub.s32 %s20, %s34
    %s129 = sor.u32 %s127, %s128
    %p130 = scmp.eq.s32.totalorder %s129, 0
    %s132 = sadd.s32 %s131, 1
    %s133 = scalar_select %p130, %s131, %s132
    %p136 = pneg %p130
    %p137 = scmp.eq.s32.totalorder %s12, 1
    %p138 = por %p136, %p137
    %p139 = scmp.ne.s32.totalorder %s131, %s134
    %p140 = scmp.eq.s32.totalorder %s12, 0
    %p141 = por %p139, %p140
    %p142 = scmp.ne.s32.totalorder %s131, %s134
    %p143 = scmp.eq.s32.totalorder %s17, 1
    %p144 = por %p142, %p143
    %p145 = scmp.ne.s32.totalorder %s134, %s135
    %p146 = scmp.eq.s32.totalorder %s17, 0
    %p147 = por %p145, %p146
    %p148 = scmp.ne.s32.totalorder %s134, %s135
    %p149 = scmp.eq.s32.totalorder %s18, 1
    %p150 = por %p148, %p149
    %p152 = scmp.ne.s32.totalorder %s135, %s151
    %p153 = scmp.eq.s32.totalorder %s18, 0
    %p154 = por %p152, %p153
    %s155 = ssub.s32 %s19, %s38
    %s156 = ssub.s32 %s20, %s34
    %s157 = sor.u32 %s155, %s156
    %p158 = scmp.eq.s32.totalorder %s157, 0
    %s160 = sadd.s32 %s159, 1
    %s161 = scalar_select %p158, %s159, %s160
    %p164 = pneg %p158
    %p165 = scmp.eq.s32.totalorder %s12, 1
    %p166 = por %p164, %p165
    %p167 = scmp.ne.s32.totalorder %s159, %s162
    %p168 = scmp.eq.s32.totalorder %s12, 0
    %p169 = por %p167, %p168
    %p170 = scmp.ne.s32.totalorder %s159, %s162
    %p171 = scmp.eq.s32.totalorder %s17, 1
    %p172 = por %p170, %p171
    %p173 = scmp.ne.s32.totalorder %s162, %s163
    %p174 = scmp.eq.s32.totalorder %s17, 0
    %p175 = por %p173, %p174
    %p176 = scmp.ne.s32.totalorder %s162, %s163
    %p177 = scmp.eq.s32.totalorder %s18, 1
    %p178 = por %p176, %p177
    %p180 = scmp.ne.s32.totalorder %s163, %s179
    %p181 = scmp.eq.s32.totalorder %s18, 0
    %p182 = por %p180, %p181
    %s183 = ssub.s32 %s19, %s38
    %s184 = ssub.s32 %s20, %s34
    %s185 = sor.u32 %s183, %s184
    %p186 = scmp.eq.s32.totalorder %s185, 0
    %s188 = sadd.s32 %s187, 1
    %s189 = scalar_select %p186, %s187, %s188
    %p192 = pneg %p186
    %p193 = scmp.eq.s32.totalorder %s12, 1
    %p194 = por %p192, %p193
    %p195 = scmp.ne.s32.totalorder %s187, %s190
    %p196 = scmp.eq.s32.totalorder %s12, 0
    %p197 = por %p195, %p196
    %p198 = scmp.ne.s32.totalorder %s187, %s190
    %p199 = scmp.eq.s32.totalorder %s17, 1
    %p200 = por %p198, %p199
    %p201 = scmp.ne.s32.totalorder %s190, %s191
    %p202 = scmp.eq.s32.totalorder %s17, 0
    %p203 = por %p201, %p202
    %p204 = scmp.ne.s32.totalorder %s190, %s191
    %p205 = scmp.eq.s32.totalorder %s18, 1
    %p206 = por %p204, %p205
    %p208 = scmp.ne.s32.totalorder %s191, %s207
    %p209 = scmp.eq.s32.totalorder %s18, 0
    %p210 = por %p208, %p209
    %p211 = scmp.le.s32.totalorder 1, %s12
    %p212 = scmp.lt.s32.totalorder %s12, 3
    %p213 = pnand %p211, %p212
    %p214 = pneg %p213
    // Predicated region
    $region9: #{joint_loss.1} parent=5 // pred_check
      _
    $region10: #{joint_loss.1} parent=5 // pred_check_branch
      %216 = sbr.rel (%p213) target = $region12
    $region11: #{joint_loss.1} parent=5 // pred_region
      %s217 = ssub.s32 %s12, 1
    $region12: #{joint_loss.1} parent=5 // pred_fallthru
      _
    %p218 = scmp.lt.s32.totalorder %s12, 2
    // Predicated region
    $region13: #{joint_loss.1} parent=5 // pred_check
      %p219 = pneg %p218
    $region14: #{joint_loss.1} parent=5 // pred_check_branch
      %221 = sbr.rel (%p219) target = $region16
    $region15: #{joint_loss.1} parent=5 // pred_region
      // Predicated region
      $region17: #{joint_loss.1} parent=15 // pred_check
        %p222 = pneg %p55
      $region18: #{joint_loss.1} parent=15 // pred_check_branch
        %224 = sbr.rel (%p222) target = $region20
      $region19: #{joint_loss.1} parent=15 // pred_region
        %s225 = sadd.s32 %s20, %s21
        %p226 = scmp.lt.s32.totalorder %s19, 1
        %s227 = scalar_select %p226, %s19, 1
        %p228 = scmp.lt.s32.totalorder %s225, 0
        %s229 = scalar_select %p228, %s225, 0
        %s230 = smul.addr %s227, 4
        %s231 = sadd.s32 %s229, %s230
        %s232 = smul.addr %s231, 2
        %s233 = scalar_lea.vmem %s0, %s232
        %s234 = sadd.s32 %s20, %s21
      $region20: #{joint_loss.1} parent=15 // pred_fallthru
        _
      // Predicated region
      $region21: #{joint_loss.1} parent=15 // pred_check
        %p235 = pneg %p85
      $region22: #{joint_loss.1} parent=15 // pred_check_branch
        %237 = sbr.rel (%p235) target = $region24
      $region23: #{joint_loss.1} parent=15 // pred_region
        %s238 = sadd.s32 %s20, %s21
        %p239 = scmp.lt.s32.totalorder %s19, 1
        %s240 = scalar_select %p239, %s19, 1
        %p241 = scmp.lt.s32.totalorder %s238, 0
        %s242 = scalar_select %p241, %s238, 0
        %s243 = smul.addr %s240, 4
        %s244 = sadd.s32 %s242, %s243
        %s245 = scalar_lea.vmem %s1, %s244
        %s246 = sadd.s32 %s20, %s21
      $region24: #{joint_loss.1} parent=15 // pred_fallthru
        _
    $region16: #{joint_loss.1} parent=5 // pred_fallthru
      _
    %p247 = scmp.le.s32.totalorder 1, %s12
    %p248 = scmp.lt.s32.totalorder %s12, 3
    %p249 = pnand %p247, %p248
    %p250 = pneg %p249
    // Predicated region
    $region25: #{joint_loss.1} parent=5 // pred_check
      _
    $region26: #{joint_loss.1} parent=5 // pred_check_branch
      %252 = sbr.rel (%p249) target = $region28
    $region27: #{joint_loss.1} parent=5 // pred_region
      %s253 = ssub.s32 %s12, 1
      %s254 = sadd.s32 %s23, %s24
      %p255 = scmp.lt.s32.totalorder %s22, 1
      %s256 = scalar_select %p255, %s22, 1
      %p257 = scmp.lt.s32.totalorder %s254, 0
      %s258 = scalar_select %p257, %s254, 0
      %s259 = smul.addr %s256, 4
      %s260 = sadd.s32 %s258, %s259
      %s261 = smul.addr %s260, 2
      %s262 = scalar_lea.vmem %s0, %s261
      %p263 = pneg %p61
      %p264 = pneg %p58
      %s265 = sadd.s32 %s23, %s24
      %p266 = scmp.lt.s32.totalorder %s22, 1
      %s267 = scalar_select %p266, %s22, 1
      %p268 = scmp.lt.s32.totalorder %s265, 0
      %s269 = scalar_select %p268, %s265, 0
      %s270 = smul.addr %s267, 4
      %s271 = sadd.s32 %s269, %s270
      %s272 = scalar_lea.vmem %s1, %s271
      %p273 = pneg %p91
      %p274 = pneg %p88
      %p275 = pneg %p119
      %p276 = pneg %p116
      %p277 = scmp.lt.s32.totalorder %s22, 1
      %s278 = scalar_select %p277, %s22, 1
      %p279 = scmp.lt.s32.totalorder %s23, 0
      %s280 = scalar_select %p279, %s23, 0
      %s281 = sadd.s32 %s280, %s278
      %s282 = scalar_lea.vmem %s2, %s281
      %p283 = pneg %p147
      %p284 = pneg %p144
      %p285 = scmp.lt.s32.totalorder %s22, 1
      %s286 = scalar_select %p285, %s22, 1
      %p287 = scmp.lt.s32.totalorder %s23, 0
      %s288 = scalar_select %p287, %s23, 0
      %s289 = sadd.s32 %s288, %s286
      %s290 = scalar_lea.vmem %s3, %s289
      %p291 = pneg %p175
      %p292 = pneg %p172
      %p293 = scmp.lt.s32.totalorder %s22, 1
      %s294 = scalar_select %p293, %s22, 1
      %p295 = scmp.lt.s32.totalorder %s23, 0
      %s296 = scalar_select %p295, %s23, 0
      %s297 = sadd.s32 %s296, %s294
      %s298 = scalar_lea.vmem %s4, %s297
      %p299 = pneg %p203
      %p300 = pneg %p200
      %p301 = scmp.lt.s32.totalorder %s22, 1
      %s302 = scalar_select %p301, %s22, 1
      %p303 = scmp.lt.s32.totalorder %s23, 0
      %s304 = scalar_select %p303, %s23, 0
      %s305 = sadd.s32 %s304, %s302
      %s306 = scalar_lea.vmem %s5, %s305
      %s307 = sadd.s32 %s23, %s24
      %p308 = scmp.lt.s32.totalorder %s22, 1
      %s309 = scalar_select %p308, %s22, 1
      %p310 = scmp.lt.s32.totalorder %s307, 0
      %s311 = scalar_select %p310, %s307, 0
      %s312 = smul.addr %s309, 4
      %s313 = sadd.s32 %s311, %s312
      %s314 = smul.addr %s313, 2
      %s315 = scalar_lea.vmem %s0, %s314
      %s316 = sadd.s32 %s23, %s24
      %s317 = sadd.s32 %s23, %s24
      %p318 = scmp.lt.s32.totalorder %s22, 1
      %s319 = scalar_select %p318, %s22, 1
      %p320 = scmp.lt.s32.totalorder %s317, 0
      %s321 = scalar_select %p320, %s317, 0
      %s322 = smul.addr %s319, 4
      %s323 = sadd.s32 %s321, %s322
      %s324 = scalar_lea.vmem %s1, %s323
      %s325 = sadd.s32 %s23, %s24
      %p326 = scmp.lt.s32.totalorder %s22, 1
      %s327 = scalar_select %p326, %s22, 1
      %p328 = scmp.lt.s32.totalorder %s23, 0
      %s329 = scalar_select %p328, %s23, 0
      %s330 = sadd.s32 %s329, %s327
      %s331 = scalar_lea.vmem %s2, %s330
      %p332 = scmp.lt.s32.totalorder %s22, 1
      %s333 = scalar_select %p332, %s22, 1
      %p334 = scmp.lt.s32.totalorder %s23, 0
      %s335 = scalar_select %p334, %s23, 0
      %s336 = sadd.s32 %s335, %s333
      %s337 = scalar_lea.vmem %s3, %s336
      %p338 = scmp.lt.s32.totalorder %s22, 1
      %s339 = scalar_select %p338, %s22, 1
      %p340 = scmp.lt.s32.totalorder %s23, 0
      %s341 = scalar_select %p340, %s23, 0
      %s342 = sadd.s32 %s341, %s339
      %s343 = scalar_lea.vmem %s4, %s342
      %p344 = scmp.lt.s32.totalorder %s22, 1
      %s345 = scalar_select %p344, %s22, 1
      %p346 = scmp.lt.s32.totalorder %s23, 0
      %s347 = scalar_select %p346, %s23, 0
      %s348 = sadd.s32 %s347, %s345
      %s349 = scalar_lea.vmem %s5, %s348
      %p350 = scmp.eq.s32.totalorder %s24, 0
      // Predicated region
      $region29: #{joint_loss.1} parent=27 // pred_check
        %p351 = pneg %p350
      $region30: #{joint_loss.1} parent=27 // pred_check_branch
        %353 = sbr.rel (%p351) target = $region32
      $region31: #{joint_loss.1} parent=27 // pred_region
        %354 = vst [vmem:[%s331] sm:$0x1] 0.0
        %355 = vst [vmem:[%s337] sm:$0x1] 0.0
        %356 = vst [vmem:[%s343] sm:$0x1] 0.0
        %357 = vst [vmem:[%s349] sm:$0x1] 0.0
      $region32: #{joint_loss.1} parent=27 // pred_fallthru
        _
      %v358 = vld [vmem:[%s315] sm:$0x3]
      %v359 = vld [vmem:[%s315 + $0x2] sm:$0x3]
      %v360 = vld [vmem:[%s315 + $0x4] sm:$0x3]
      %v361 = vld [vmem:[%s315 + $0x6] sm:$0x3]
      %v362 = vld [vmem:[%s324] sm:$0x1]
      %v363 = vld [vmem:[%s324 + $0x1] sm:$0x1]
      %v364 = vld [vmem:[%s324 + $0x2] sm:$0x1]
      %v365 = vld [vmem:[%s324 + $0x3] sm:$0x1]
      %v366 = vunpack.c.l.bf16 %v362
      %v367 = vunpack.c.l.bf16 %v363
      %v368 = vunpack.c.l.bf16 %v364
      %v369 = vunpack.c.l.bf16 %v365
      %vm370 = vcmask 1041408
      %v371 = vsel %vm370, %v358, -inf
      %v372 = vsel %vm370, %v359, -inf
      %v373 = vsel %vm370, %v360, -inf
      %v374 = vsel %vm370, %v361, -inf
      %v375 = vmax.f32 %v371, %v372
      %v376 = vmax.f32 %v373, %v374
      %v377 = vmax.f32 %v375, %v376
      %v378 = vsub.f32 %v358, %v377
      %v379 = vsub.f32 %v359, %v377
      %v380 = vsub.f32 %v360, %v377
      %v381 = vsub.f32 %v361, %v377
      %v382 = vmul.f32 %v378, 1.442695
      %v383 = vpow.pop %v382
      %v384 = vmul.f32 %v379, 1.442695
      %v385 = vpow.pop %v384
      %v386 = vmul.f32 %v380, 1.442695
      %v387 = vpow.pop %v386
      %v388 = vmul.f32 %v381, 1.442695
      %v389 = vpow.pop %v388
      %v390 = vsel %vm370, %v383, 0.0
      %v391 = vsel %vm370, %v385, 0.0
      %v392 = vadd.f32 %v390, %v391
      %v393 = vsel %vm370, %v387, 0.0
      %v394 = vadd.f32 %v392, %v393
      %v395 = vsel %vm370, %v389, 0.0
      %v396 = vadd.f32 %v394, %v395
      %v397 = vlog2.pop %v396
      %v398 = vmul.f32 %v397, 0.6931472
      %v399 = vsel %vm370, %v366, 0.0
      %v400 = vsel %vm370, %v367, 0.0
      %v401 = vadd.f32 %v399, %v400
      %v402 = vsel %vm370, %v368, 0.0
      %v403 = vadd.f32 %v401, %v402
      %v404 = vsel %vm370, %v369, 0.0
      %v405 = vadd.f32 %v403, %v404
      %v406 = vmul.f32 %v366, %v378
      %v407 = vmul.f32 %v367, %v379
      %v408 = vmul.f32 %v368, %v380
      %v409 = vmul.f32 %v369, %v381
      %v410 = vsel %vm370, %v406, 0.0
      %v411 = vsel %vm370, %v407, 0.0
      %v412 = vadd.f32 %v410, %v411
      %v413 = vsel %vm370, %v408, 0.0
      %v414 = vadd.f32 %v412, %v413
      %v415 = vsel %vm370, %v409, 0.0
      %v416 = vadd.f32 %v414, %v415
      %v417 = vmul.f32 %v398, %v405
      %v418 = vsub.f32 %v417, %v416
      %v419 = vsub.f32 0.0, %v377
      %v420 = vmax.f32 %v419, -80.0
      %v421 = vmin.f32 %v420, 80.0
      %v422 = vmul.f32 %v421, 1.442695
      %v423 = vpow.pop %v422
      %v424 = vadd.f32 %v383, %v423
      %v425 = vadd.f32 %v385, %v423
      %v426 = vadd.f32 %v387, %v423
      %v427 = vadd.f32 %v389, %v423
      %v428 = vrcp.pop %v424
      %v429 = vrcp.pop %v425
      %v430 = vrcp.pop %v426
      %v431 = vrcp.pop %v427
      %v432 = vmul.f32 %v424, %v428
      %v433 = vmul.f32 %v425, %v429
      %v434 = vmul.f32 %v426, %v430
      %v435 = vmul.f32 %v427, %v431
      %v436 = vsub.f32 2.0, %v432
      %v437 = vsub.f32 2.0, %v433
      %v438 = vsub.f32 2.0, %v434
      %v439 = vsub.f32 2.0, %v435
      %v440 = vmul.f32 %v428, %v436
      %v441 = vmul.f32 %v429, %v437
      %v442 = vmul.f32 %v430, %v438
      %v443 = vmul.f32 %v431, %v439
      %v444 = vmul.f32 %v383, %v440
      %v445 = vmul.f32 %v385, %v441
      %v446 = vmul.f32 %v387, %v442
      %v447 = vmul.f32 %v389, %v443
      %v448 = vmul.f32 %v444, %v366
      %v449 = vmul.f32 %v445, %v367
      %v450 = vmul.f32 %v446, %v368
      %v451 = vmul.f32 %v447, %v369
      %v452 = vsel %vm370, %v448, 0.0
      %v453 = vsel %vm370, %v449, 0.0
      %v454 = vadd.f32 %v452, %v453
      %v455 = vsel %vm370, %v450, 0.0
      %v456 = vadd.f32 %v454, %v455
      %v457 = vsel %vm370, %v451, 0.0
      %v458 = vadd.f32 %v456, %v457
      %v459 = vsel %vm370, %v444, 0.0
      %v460 = vsel %vm370, %v445, 0.0
      %v461 = vadd.f32 %v459, %v460
      %v462 = vsel %vm370, %v446, 0.0
      %v463 = vadd.f32 %v461, %v462
      %v464 = vsel %vm370, %v447, 0.0
      %v465 = vadd.f32 %v463, %v464
      %v466 = vld [vmem:[%s331] sm:$0x1]
      %v467 = vsel %vm370, %v418, 0.0
      %v468 = vrot.slane %v467, 4
      %v469 = vadd.f32 %v467, %v468
      %v470 = vrot.slane %v469, 2
      %v471 = vadd.f32 %v469, %v470
      %v472 = vrot.slane %v471, 1
      %v473 = vadd.f32 %v471, %v472
      %v474 = vadd.f32 %v466, %v473
      %475 = vst [vmem:[%s331] sm:$0x1] %v474
      %v476 = vld [vmem:[%s337] sm:$0x1]
      %v477 = vsel %vm370, %v458, 0.0
      %v478 = vrot.slane %v477, 4
      %v479 = vadd.f32 %v477, %v478
      %v480 = vrot.slane %v479, 2
      %v481 = vadd.f32 %v479, %v480
      %v482 = vrot.slane %v481, 1
      %v483 = vadd.f32 %v481, %v482
      %v484 = vadd.f32 %v476, %v483
      %485 = vst [vmem:[%s337] sm:$0x1] %v484
      %v486 = vld [vmem:[%s343] sm:$0x1]
      %v487 = vsel %vm370, %v405, 0.0
      %v488 = vrot.slane %v487, 4
      %v489 = vadd.f32 %v487, %v488
      %v490 = vrot.slane %v489, 2
      %v491 = vadd.f32 %v489, %v490
      %v492 = vrot.slane %v491, 1
      %v493 = vadd.f32 %v491, %v492
      %v494 = vadd.f32 %v486, %v493
      %495 = vst [vmem:[%s343] sm:$0x1] %v494
      %v496 = vld [vmem:[%s349] sm:$0x1]
      %v497 = vsel %vm370, %v465, 0.0
      %v498 = vrot.slane %v497, 4
      %v499 = vadd.f32 %v497, %v498
      %v500 = vrot.slane %v499, 2
      %v501 = vadd.f32 %v499, %v500
      %v502 = vrot.slane %v501, 1
      %v503 = vadd.f32 %v501, %v502
      %v504 = vadd.f32 %v496, %v503
      %505 = vst [vmem:[%s349] sm:$0x1] %v504
      %p506 = scmp.lt.s32.totalorder %s22, 1
      %s507 = scalar_select %p506, %s22, 1
      %p508 = scmp.lt.s32.totalorder %s23, 0
      %s509 = scalar_select %p508, %s23, 0
      %s510 = sadd.s32 %s509, %s507
      %s511 = scalar_lea.vmem %s2, %s510
      %p512 = scmp.lt.s32.totalorder %s22, 1
      %s513 = scalar_select %p512, %s22, 1
      %p514 = scmp.lt.s32.totalorder %s23, 0
      %s515 = scalar_select %p514, %s23, 0
      %s516 = sadd.s32 %s515, %s513
      %s517 = scalar_lea.vmem %s3, %s516
      %p518 = scmp.lt.s32.totalorder %s22, 1
      %s519 = scalar_select %p518, %s22, 1
      %p520 = scmp.lt.s32.totalorder %s23, 0
      %s521 = scalar_select %p520, %s23, 0
      %s522 = sadd.s32 %s521, %s519
      %s523 = scalar_lea.vmem %s4, %s522
      %p524 = scmp.lt.s32.totalorder %s22, 1
      %s525 = scalar_select %p524, %s22, 1
      %p526 = scmp.lt.s32.totalorder %s23, 0
      %s527 = scalar_select %p526, %s23, 0
      %s528 = sadd.s32 %s527, %s525
      %s529 = scalar_lea.vmem %s5, %s528
      // Predicated region
      $region33: #{joint_loss.1} parent=27 // pred_check
        %p530 = pneg %p116
      $region34: #{joint_loss.1} parent=27 // pred_check_branch
        %532 = sbr.rel (%p530) target = $region36
      $region35: #{joint_loss.1} parent=27 // pred_region
        _
      $region36: #{joint_loss.1} parent=27 // pred_fallthru
        _
      // Predicated region
      $region37: #{joint_loss.1} parent=27 // pred_check
        %p533 = pneg %p144
      $region38: #{joint_loss.1} parent=27 // pred_check_branch
        %535 = sbr.rel (%p533) target = $region40
      $region39: #{joint_loss.1} parent=27 // pred_region
        _
      $region40: #{joint_loss.1} parent=27 // pred_fallthru
        _
      // Predicated region
      $region41: #{joint_loss.1} parent=27 // pred_check
        %p536 = pneg %p172
      $region42: #{joint_loss.1} parent=27 // pred_check_branch
        %538 = sbr.rel (%p536) target = $region44
      $region43: #{joint_loss.1} parent=27 // pred_region
        _
      $region44: #{joint_loss.1} parent=27 // pred_fallthru
        _
      // Predicated region
      $region45: #{joint_loss.1} parent=27 // pred_check
        %p539 = pneg %p200
      $region46: #{joint_loss.1} parent=27 // pred_check_branch
        %541 = sbr.rel (%p539) target = $region48
      $region47: #{joint_loss.1} parent=27 // pred_region
        _
      $region48: #{joint_loss.1} parent=27 // pred_fallthru
        _
    $region28: #{joint_loss.1} parent=5 // pred_fallthru
      _
    %p542 = scmp.le.s32.totalorder 2, %s12
    // Predicated region
    $region49: #{joint_loss.1} parent=5 // pred_check
      %p543 = pneg %p542
    $region50: #{joint_loss.1} parent=5 // pred_check_branch
      %545 = sbr.rel (%p543) target = $region52
    $region51: #{joint_loss.1} parent=5 // pred_region
      %s546 = ssub.s32 %s12, 2
      // Predicated region
      $region53: #{joint_loss.1} parent=51 // pred_check
        %p547 = pneg %p122
      $region54: #{joint_loss.1} parent=51 // pred_check_branch
        %549 = sbr.rel (%p547) target = $region56
      $region55: #{joint_loss.1} parent=51 // pred_region
        %p550 = scmp.lt.s32.totalorder %s25, 1
        %s551 = scalar_select %p550, %s25, 1
        %p552 = scmp.lt.s32.totalorder %s26, 0
        %s553 = scalar_select %p552, %s26, 0
        %s554 = sadd.s32 %s553, %s551
        %s555 = scalar_lea.vmem %s2, %s554
      $region56: #{joint_loss.1} parent=51 // pred_fallthru
        _
      // Predicated region
      $region57: #{joint_loss.1} parent=51 // pred_check
        %p556 = pneg %p150
      $region58: #{joint_loss.1} parent=51 // pred_check_branch
        %558 = sbr.rel (%p556) target = $region60
      $region59: #{joint_loss.1} parent=51 // pred_region
        %p559 = scmp.lt.s32.totalorder %s25, 1
        %s560 = scalar_select %p559, %s25, 1
        %p561 = scmp.lt.s32.totalorder %s26, 0
        %s562 = scalar_select %p561, %s26, 0
        %s563 = sadd.s32 %s562, %s560
        %s564 = scalar_lea.vmem %s3, %s563
      $region60: #{joint_loss.1} parent=51 // pred_fallthru
        _
      // Predicated region
      $region61: #{joint_loss.1} parent=51 // pred_check
        %p565 = pneg %p178
      $region62: #{joint_loss.1} parent=51 // pred_check_branch
        %567 = sbr.rel (%p565) target = $region64
      $region63: #{joint_loss.1} parent=51 // pred_region
        %p568 = scmp.lt.s32.totalorder %s25, 1
        %s569 = scalar_select %p568, %s25, 1
        %p570 = scmp.lt.s32.totalorder %s26, 0
        %s571 = scalar_select %p570, %s26, 0
        %s572 = sadd.s32 %s571, %s569
        %s573 = scalar_lea.vmem %s4, %s572
      $region64: #{joint_loss.1} parent=51 // pred_fallthru
        _
      // Predicated region
      $region65: #{joint_loss.1} parent=51 // pred_check
        %p574 = pneg %p206
      $region66: #{joint_loss.1} parent=51 // pred_check_branch
        %576 = sbr.rel (%p574) target = $region68
      $region67: #{joint_loss.1} parent=51 // pred_region
        %p577 = scmp.lt.s32.totalorder %s25, 1
        %s578 = scalar_select %p577, %s25, 1
        %p579 = scmp.lt.s32.totalorder %s26, 0
        %s580 = scalar_select %p579, %s26, 0
        %s581 = sadd.s32 %s580, %s578
        %s582 = scalar_lea.vmem %s5, %s581
      $region68: #{joint_loss.1} parent=51 // pred_fallthru
        _
    $region52: #{joint_loss.1} parent=5 // pred_fallthru
      _
  $region6: #{joint_loss.1} parent=0 // loop_footer
    %s16 = sadd.s32 1, %s12
  $region7: #{joint_loss.1} parent=0 // loop_footer_branch
    %11 = sbr.rel target = $region3
  $region8: #{joint_loss.1} parent=0 // loop_exit
    _

</llo_original>
